<compile_context>
chip_gen: v6e
topology: v6e:2x2x1
jax: 0.10.0
libtpu: 0.0.40
codegen_flags: <defaults>
</compile_context>

<pallas_src>
import jax
import jax.numpy as jnp
from jax.experimental import pallas as pl
from jax.experimental.pallas import tpu as pltpu

_EPS_SQ = 1e-24          # F.normalize(eps=1e-12) clamp, applied to the squared norm


def _round_up(x, m):
    return ((x + m - 1) // m) * m


def _vmem_limit_bytes():
    """Generation-aware scoped-VMEM limit (v5e/v6e: 128 MiB phys, v7x: 64 MiB)."""
    cap = 64 * 1024 * 1024
    try:
        info = pltpu.get_tpu_info()
        cap = int(getattr(info, "vmem_capacity_bytes", cap))
    except Exception:
        pass
    return int(max(32 * 1024 * 1024, min(cap // 2, 96 * 1024 * 1024)))


def _pick_tile(n, target, align):
    """Largest `align`-multiple divisor of n that is <= target.

    Falls back to the full extent (always legal under the (8, 128) rule) only
    when that stays modest; otherwise raises so an awkward batch size cannot
    silently blow the VMEM budget."""
    if n <= target:
        return n
    start = target - (target % align)
    for t in range(start, 0, -align):
        if n % t == 0:
            return t
    if n <= 8 * target:
        # TODO(synk): pad n up to a multiple of `align` in the wrapper instead.
        return n
    raise ValueError(
        f"no {align}-aligned tile <= {target} divides n={n}; pad the batch")


def _l2_normalize(x):
    # x / max(||x||, 1e-12)  ==  x * rsqrt(max(||x||^2, 1e-24))   (EUP rsqrt)
    return x * jax.lax.rsqrt(
        jnp.maximum(jnp.sum(x * x, axis=-1, keepdims=True), _EPS_SQ))


# --------------------------------------------------------------------------
# Kernel 1: relation-grouped TransR projection + L2 normalization.
#   Grid step g: rows [g*3*block_m, (g+1)*3*block_m) of the padded, sorted,
#   interleaved entity slab all share relation block_rel[g]; one dense
#   (3*block_m, D) x (D, K) MXU matmul per step.
# --------------------------------------------------------------------------
def _kg_proj_kernel(block_rel_ref, ent_ref, w_ref, out_ref):
    del block_rel_ref                 # consumed by the index_maps
    proj = jnp.dot(ent_ref[...], w_ref[0],
                   preferred_element_type=jnp.float32)
    out_ref[...] = _l2_normalize(proj)


def cke_kg_projection(h, r, pos_t, neg_t, kg_entity_embed, trans_W, *,
                      block_m=None):
    """Grouped TransR projection. Returns (h_e, pos_t_e, neg_t_e), each (B, K)."""
    B = int(h.shape[0])
    R, D, K = (int(s) for s in trans_W.shape)

    if block_m is None:
        # Roughly one block per relation group, capped at 128 rows.
        block_m = max(8, min(128, _round_up(pl.cdiv(B, max(R, 1)), 8)))
    block_m = _round_up(int(block_m), 8)

    # ---- relation-group bookkeeping (plain XLA ops in the wrapper) ----------
    r = jnp.clip(r.astype(jnp.int32), 0, R - 1)     # no runtime OOB on the DMA
    counts = jnp.zeros((R,), jnp.int32).at[r].add(1)
    padded = ((counts + block_m - 1) // block_m) * block_m
    unpad_starts = jnp.cumsum(counts) - counts
    pad_ends = jnp.cumsum(padded)
    pad_starts = pad_ends - padded

    order = jnp.argsort(r, stable=True)             # sorted-pos -> original idx
    r_sorted = r[order]
    ranks = jnp.arange(B, dtype=jnp.int32) - unpad_starts[r_sorted]
    pos_sorted = pad_starts[r_sorted] + ranks       # padded slot of sorted row
    pos = jnp.zeros((B,), jnp.int32).at[order].set(pos_sorted)  # per original b

    # Static padded capacity: each nonzero group wastes at most block_m-1 rows.
    P = _round_up(B + min(R, B) * (block_m - 1), block_m)
    G = P // block_m
    block_rel = jnp.searchsorted(
        pad_ends, jnp.arange(G, dtype=jnp.int32) * block_m, side="right")
    block_rel = jnp.minimum(block_rel, R - 1).astype(jnp.int32)

    # Interleave (h, pos_t, neg_t) per example -> one lane/sublane-dense
    # (3P, D) operand. Padded slots point at entity 0; their outputs are
    # dropped when un-permuting (normalization is eps-clamped, so no NaNs).
    ent_idx = jnp.zeros((3 * P,), jnp.int32)
    ent_idx = ent_idx.at[3 * pos].set(h.astype(jnp.int32))
    ent_idx = ent_idx.at[3 * pos + 1].set(pos_t.astype(jnp.int32))
    ent_idx = ent_idx.at[3 * pos + 2].set(neg_t.astype(jnp.int32))
    ent_pad = jnp.take(kg_entity_embed, ent_idx, axis=0)       # (3P, D)

    out = pl.pallas_call(
        _kg_proj_kernel,
        grid_spec=pltpu.PrefetchScalarGridSpec(
            num_scalar_prefetch=1,
            grid=(G,),
            in_specs=[
                pl.BlockSpec((3 * block_m, D), lambda g, br: (g, 0)),
                # Exactly one (D, K) relation matrix DMA'd per grid step.
                pl.BlockSpec((1, D, K), lambda g, br: (br[g], 0, 0)),
            ],
            out_specs=pl.BlockSpec((3 * block_m, K), lambda g, br: (g, 0)),
        ),
        out_shape=jax.ShapeDtypeStruct((3 * P, K), jnp.float32),
        compiler_params=pltpu.CompilerParams(
            dimension_semantics=("parallel",),
            vmem_limit_bytes=_vmem_limit_bytes()),
    )(block_rel, ent_pad, trans_W)

    h_e = jnp.take(out, 3 * pos, axis=0)
    pos_t_e = jnp.take(out, 3 * pos + 1, axis=0)
    neg_t_e = jnp.take(out, 3 * pos + 2, axis=0)
    return h_e, pos_t_e, neg_t_e


# --------------------------------------------------------------------------
# Kernel 2: CF combine (item + entity embedding) + relation L2 normalization.
# Purely memory-bound elementwise/EUP work, tiled over the batch.
# --------------------------------------------------------------------------
def _cf_rel_kernel(pos_i_ref, pos_kg_ref, neg_i_ref, neg_kg_ref, r_ref,
                   pos_out, neg_out, r_out):
    pos_out[...] = pos_i_ref[...] + pos_kg_ref[...]
    neg_out[...] = neg_i_ref[...] + neg_kg_ref[...]
    r_out[...] = _l2_normalize(r_ref[...])


def cke_cf_and_relation(pos_i_e, pos_i_kg_e, neg_i_e, neg_i_kg_e, r_e, *,
                        tile_b=None):
    B, D = pos_i_e.shape
    K = r_e.shape[1]
    if tile_b is None:
        tile_b = _pick_tile(B, 512, 8)
    assert B % tile_b == 0

    row_d = pl.BlockSpec((tile_b, D), lambda i: (i, 0))
    row_k = pl.BlockSpec((tile_b, K), lambda i: (i, 0))
    return pl.pallas_call(
        _cf_rel_kernel,
        grid=(B // tile_b,),
        in_specs=[row_d, row_d, row_d, row_d, row_k],
        out_specs=(row_d, row_d, row_k),
        out_shape=(jax.ShapeDtypeStruct((B, D), jnp.float32),
                   jax.ShapeDtypeStruct((B, D), jnp.float32),
                   jax.ShapeDtypeStruct((B, K), jnp.float32)),
        compiler_params=pltpu.CompilerParams(
            dimension_semantics=("parallel",),
            vmem_limit_bytes=_vmem_limit_bytes()),
    )(pos_i_e, pos_i_kg_e, neg_i_e, neg_i_kg_e, r_e)


# --------------------------------------------------------------------------
# Kernel 3: batch predictions  preds = u_e @ pos_comb.T   (B x B)
# The item operand is transposed ONCE in the wrapper so the rhs block arrives
# as a ready-to-feed (D, tile_i) slab (no per-block in-kernel transpose).
# --------------------------------------------------------------------------
def _pred_kernel(u_ref, pT_ref, out_ref):
    out_ref[...] = jnp.dot(u_ref[...], pT_ref[...],
                           preferred_element_type=jnp.float32)


def batch_predictions(u_e, pos_comb, *, tile_u=None, tile_i=None):
    B, D = u_e.shape
    Bi = pos_comb.shape[0]
    if tile_u is None:
        tile_u = _pick_tile(B, 512, 8)
    if tile_i is None:
        tile_i = _pick_tile(Bi, 512, 128)    # keep the output lane-dense
    assert B % tile_u == 0 and Bi % tile_i == 0

    pos_comb_t = pos_comb.T                  # one-time (B, D) -> (D, B)
    return pl.pallas_call(
        _pred_kernel,
        grid=(B // tile_u, Bi // tile_i),
        in_specs=[
            pl.BlockSpec((tile_u, D), lambda i, j: (i, 0)),
            pl.BlockSpec((D, tile_i), lambda i, j: (0, j)),
        ],
        out_specs=pl.BlockSpec((tile_u, tile_i), lambda i, j: (i, j)),
        out_shape=jax.ShapeDtypeStruct((B, Bi), jnp.float32),
        compiler_params=pltpu.CompilerParams(
            dimension_semantics=("parallel", "parallel"),
            vmem_limit_bytes=_vmem_limit_bytes()),
    )(u_e, pos_comb_t)


# --------------------------------------------------------------------------
# CKE module (forward, mode='train') built on the kernels above.
# --------------------------------------------------------------------------
class CKEPallas:
    def __init__(self, n_users, n_items, n_entities, n_relations,
                 emb_dim, kge_dim, key):
        ks = jax.random.split(key, 5)

        def xavier_uniform(k, shape):
            fan_in, fan_out = shape[-2], shape[-1]
            limit = jnp.sqrt(6.0 / (fan_in + fan_out))
            return jax.random.uniform(k, shape, jnp.float32, -limit, limit)

        def xavier_normal(k, shape):
            fan_in, fan_out = shape[-2], shape[-1]
            std = jnp.sqrt(2.0 / (fan_in + fan_out))
            return std * jax.random.normal(k, shape, jnp.float32)

        self.user_embed = xavier_uniform(ks[0], (n_users, emb_dim))
        self.item_embed = xavier_uniform(ks[1], (n_items, emb_dim))
        self.kg_entity_embed = xavier_uniform(ks[2], (n_entities, emb_dim))
        self.kg_relation_embed = xavier_uniform(ks[3], (n_relations, kge_dim))
        self.trans_W = xavier_normal(ks[4], (n_relations, emb_dim, kge_dim))
        self.emb_dim = emb_dim
        self.kge_dim = kge_dim

    def forward(self, batch_data, *, block_m=None, tile_b=None):
        u = jnp.asarray(batch_data["users"], jnp.int32)
        pos_i = jnp.asarray(batch_data["pos_items"], jnp.int32)
        neg_i = jnp.asarray(batch_data["neg_items"], jnp.int32)
        h = jnp.asarray(batch_data["heads"], jnp.int32)
        r = jnp.asarray(batch_data["relations"], jnp.int32)
        pos_t = jnp.asarray(batch_data["pos_tails"], jnp.int32)
        neg_t = jnp.asarray(batch_data["neg_tails"], jnp.int32)

        # TODO(synk): user/item/relation embedding row gathers stay as XLA
        # jnp.take; the TransR projection, CF combine/normalize and the BxB
        # prediction run in Pallas.
        u_e = jnp.take(self.user_embed, u, axis=0)
        pos_i_e = jnp.take(self.item_embed, pos_i, axis=0)
        neg_i_e = jnp.take(self.item_embed, neg_i, axis=0)
        pos_i_kg_e = jnp.take(self.kg_entity_embed, pos_i, axis=0)
        neg_i_kg_e = jnp.take(self.kg_entity_embed, neg_i, axis=0)
        r_e = jnp.take(self.kg_relation_embed, r, axis=0)

        h_o, pos_t_o, neg_t_o = cke_kg_projection(
            h, r, pos_t, neg_t, self.kg_entity_embed, self.trans_W,
            block_m=block_m)

        pos_comb, neg_comb, r_o = cke_cf_and_relation(
            pos_i_e, pos_i_kg_e, neg_i_e, neg_i_kg_e, r_e, tile_b=tile_b)

        preds = batch_predictions(u_e, pos_comb)

        return (u_e, pos_comb, neg_comb, h_o, r_o, pos_t_o, neg_t_o, preds)


# --------------------------------------------------------------------------
# Pure-JAX reference (numerical sanity check against the torch semantics)
# --------------------------------------------------------------------------
def _reference_forward(model, batch_data):
    u = batch_data["users"]; pos_i = batch_data["pos_items"]
    neg_i = batch_data["neg_items"]
    h = batch_data["heads"]; r = batch_data["relations"]
    pos_t = batch_data["pos_tails"]; neg_t = batch_data["neg_tails"]

    u_e = model.user_embed[u]
    pos_comb = model.item_embed[pos_i] + model.kg_entity_embed[pos_i]
    neg_comb = model.item_embed[neg_i] + model.kg_entity_embed[neg_i]
    preds = u_e @ pos_comb.T

    trans_M = model.trans_W[r]

    def norm(x):
        n = jnp.sqrt(jnp.sum(x * x, axis=1, keepdims=True))
        return x / jnp.maximum(n, 1e-12)

    h_e = norm(jnp.einsum("bd,bdk->bk", model.kg_entity_embed[h], trans_M))
    pos_t_e = norm(jnp.einsum("bd,bdk->bk", model.kg_entity_embed[pos_t], trans_M))
    neg_t_e = norm(jnp.einsum("bd,bdk->bk", model.kg_entity_embed[neg_t], trans_M))
    r_e = norm(model.kg_relation_embed[r])
    return (u_e, pos_comb, neg_comb, h_e, r_e, pos_t_e, neg_t_e, preds)


if __name__ == "__main__":
    key = jax.random.PRNGKey(0)
    k_model, k_batch = jax.random.split(key)

    n_users, n_items, n_entities, n_relations = 48, 56, 80, 6
    emb_dim, kge_dim = 32, 64
    B = 16

    model = CKEPallas(n_users, n_items, n_entities, n_relations,
                      emb_dim, kge_dim, k_model)

    kb = jax.random.split(k_batch, 7)
    batch_data = {
        "users":      jax.random.randint(kb[0], (B,), 0, n_users,     jnp.int32),
        "pos_items":  jax.random.randint(kb[1], (B,), 0, n_items,     jnp.int32),
        "neg_items":  jax.random.randint(kb[2], (B,), 0, n_items,     jnp.int32),
        "heads":      jax.random.randint(kb[3], (B,), 0, n_entities,  jnp.int32),
        "relations":  jax.random.randint(kb[4], (B,), 0, n_relations, jnp.int32),
        "pos_tails":  jax.random.randint(kb[5], (B,), 0, n_entities,  jnp.int32),
        "neg_tails":  jax.random.randint(kb[6], (B,), 0, n_entities,  jnp.int32),
    }

    # block_m=8 forces several relation-grouped grid steps (plus capacity-pad
    # blocks) so the sorted/padded bookkeeping and the scalar-prefetched
    # per-block relation index are exercised end to end.
    outs = model.forward(batch_data, block_m=8)
    outs = jax.block_until_ready(outs)

    refs = _reference_forward(model, batch_data)
    names = ["u_e", "pos_i_e", "neg_i_e", "h_e", "r_e",
             "pos_t_e", "neg_t_e", "batch_predictions"]
    for name, o, rf in zip(names, outs, refs):
        assert o.shape == rf.shape, (name, o.shape, rf.shape)
        assert jnp.allclose(o, rf, atol=1e-5, rtol=1e-5), (
            name, float(jnp.max(jnp.abs(o - rf))))

    print("KERNEL_OK")
</pallas_src>

<mosaic_0001>
module attributes {stable_mosaic.version = 11 : i64} {
  func.func @_kg_proj_kernel(%arg0: i32, %arg1: memref<8xi32, #tpu.memory_space<smem>>, %arg2: memref<24x32xf32, #tpu.memory_space<vmem>>, %arg3: memref<1x32x64xf32, #tpu.memory_space<vmem>>, %arg4: memref<24x64xf32, #tpu.memory_space<vmem>>) attributes {dimension_semantics = [#tpu.dimension_semantics<parallel>], iteration_bounds = array<i64: 8>, scalar_prefetch = 1 : i64, scratch_operands = 0 : i64, tpu.core_type = #tpu.core_type<tc>, window_params = [{transform_indices = @transform_0, window_bounds = array<i64: 24, 32>}, {transform_indices = @transform_1, window_bounds = array<i64: 1, 32, 64>}, {transform_indices = @transform_2, window_bounds = array<i64: 24, 64>}]} {
    %c0 = arith.constant 0 : index
    %c0_0 = arith.constant 0 : index
    %0 = vector.load %arg2[%c0, %c0_0] : memref<24x32xf32, #tpu.memory_space<vmem>>, vector<24x32xf32>
    %c0_1 = arith.constant 0 : index
    %c0_2 = arith.constant 0 : index
    %c0_3 = arith.constant 0 : index
    %1 = vector.load %arg3[%c0_1, %c0_2, %c0_3] : memref<1x32x64xf32, #tpu.memory_space<vmem>>, vector<1x32x64xf32>
    %2 = vector.shape_cast %1 : vector<1x32x64xf32> to vector<32x64xf32>
    %cst = arith.constant dense<0.000000e+00> : vector<24x64xf32>
    %3 = tpu.matmul %0, %2, %cst {dimension_numbers = #tpu.dot_dimension_numbers<[1], [0], [0], [1], [0, 0, 1, 1], [], []>} : vector<24x32xf32>, vector<32x64xf32>, vector<24x64xf32> -> vector<24x64xf32>
    %4 = arith.mulf %3, %3 : vector<24x64xf32>
    %cst_4 = arith.constant dense<0.000000e+00> : vector<24xf32>
    %5 = vector.multi_reduction <add>, %4, %cst_4 [1] : vector<24x64xf32> to vector<24xf32>
    %6 = vector.shape_cast %5 : vector<24xf32> to vector<24x1xf32>
    %cst_5 = arith.constant 1.000000e-24 : f32
    %7 = vector.broadcast %cst_5 : f32 to vector<24x1xf32>
    %8 = arith.maximumf %6, %7 : vector<24x1xf32>
    %9 = math.rsqrt %8 : vector<24x1xf32>
    %10 = vector.broadcast %9 : vector<24x1xf32> to vector<24x64xf32>
    %11 = arith.mulf %3, %10 : vector<24x64xf32>
    %c0_6 = arith.constant 0 : index
    %c0_7 = arith.constant 0 : index
    %12 = vector.load %arg4[%c0_6, %c0_7] : memref<24x64xf32, #tpu.memory_space<vmem>>, vector<24x64xf32>
    tpu.vector_store %arg4[%c0_6, %c0_7], %11 {strides = array<i32>} : memref<24x64xf32, #tpu.memory_space<vmem>>, vector<24x64xf32>,
    return
  }
  func.func @transform_0(%arg0: i32, %arg1: memref<8xi32, #tpu.memory_space<smem>>) -> (i32, i32) {
    %c0_i32 = arith.constant 0 : i32
    %c0_i32_0 = arith.constant 0 : i32
    return %arg0, %c0_i32 : i32, i32
  }
  func.func @transform_1(%arg0: i32, %arg1: memref<8xi32, #tpu.memory_space<smem>>) -> (i32, i32, i32) {
    %0 = arith.index_cast %arg0 : i32 to index
    %1 = memref.load %arg1[%0] : memref<8xi32, #tpu.memory_space<smem>>
    %c0_i32 = arith.constant 0 : i32
    %c0_i32_0 = arith.constant 0 : i32
    %c0_i32_1 = arith.constant 0 : i32
    return %1, %c0_i32, %c0_i32_0 : i32, i32, i32
  }
  func.func @transform_2(%arg0: i32, %arg1: memref<8xi32, #tpu.memory_space<smem>>) -> (i32, i32) {
    %c0_i32 = arith.constant 0 : i32
    %c0_i32_0 = arith.constant 0 : i32
    return %arg0, %c0_i32 : i32, i32
  }
}

</mosaic_0001>

<llo_original>
// kernel: tpu_custom_call.1
$region0: #{tpu_custom_call.1}
  #allocation0 [shape = 'u32[]', space=smem, size = 0x4, offset = 0x4, fixed_abs, tag = 'smem constant byte address 0x4 - core index']
  #allocation1 [shape = 'u32[144,128]{1,0:T(1,128)}', space=vmem, size = 0x12000, scoped, tag = 'internal scratch']
  #allocation2 [shape = 's32[1]{0}', space=sflag, size = 0x4, scoped, tag = 'scoped memory for tpu_custom_call.1']
  #allocation3 [shape = 'u8[512]{0}', space=smem, size = 0x200, scoped, tag = 'prefetched SMEM operand 0']
  %s0 = inlined_call_operand.vmem [shape: s32[8], index: 0, kind: input, shape index: {}]
  %s1 = inlined_call_operand.vmem [shape: f32[192,32], index: 1, kind: input, shape index: {}]
  %s2 = inlined_call_operand.vmem [shape: f32[6,32,64], index: 2, kind: input, shape index: {}]
  %s3 = inlined_call_operand.vmem [shape: f32[192,64], index: 3, kind: output, shape index: {}]
  %s4 = sld [smem:[#allocation0]]
  $region41: #{tpu_custom_call.1} parent=0
    _
  %s6 = ssub.s32 1, %s4
  %s7 = scalar_select 0, %s6, %s4
  %s8 = sshll.u32 %s0, 4
  %s9 = int_to_ptr.vmem [resolvable:$true] %s8
  %11 = dma.vmem_to_smem %s9, 16, [#allocation3], [#allocation2]
  %12 = dma.done [#allocation2], 16
  %13 = sfence
  loop: start=0, step=1, limit=10
  $region2: #{tpu_custom_call.1} parent=0 // loop_pre_header
    _
  $region3: #{tpu_custom_call.1} parent=0 // loop_header
    %s15 = sphi 0, %s19
    %p16 = scmp.ge.s32.totalorder %s15, 10
    %s25 = sphi 0, %s27
    %s28 = sphi 0, %s25
    %s29 = sphi 0, %s28
    %s45 = sphi 0, %s29
    %s53 = sphi 0, %s55
    %s56 = sphi 0, %s53
    %s57 = sphi 0, %s56
    %s73 = sphi 0, %s57
    %s79 = sphi 0, %s81
    %s82 = sphi 0, %s79
    %s83 = sphi 0, %s82
    %s99 = sphi 0, %s83
  $region4: #{tpu_custom_call.1} parent=0 // loop_header_branch
    %18 = sbr.rel (%p16) target = $region8
  $region5: #{tpu_custom_call.1} parent=0 // loop_body
    %s20 = ssub.s32 %s15, 1
    %s21 = ssub.s32 %s15, 2
    %s22 = sadd.s32 %s15, 1
    %s23 = ssub.s32 %s15, %s22
    %p24 = scmp.eq.s32.totalorder %s23, 0
    %s26 = sadd.s32 %s25, 1
    %s27 = scalar_select %p24, %s25, %s26
    %p30 = pneg %p24
    %p31 = scmp.eq.s32.totalorder %s15, 7
    %p32 = por %p30, %p31
    %p33 = scmp.ne.s32.totalorder %s25, %s28
    %p34 = scmp.eq.s32.totalorder %s15, 0
    %p35 = por %p33, %p34
    %p36 = scmp.ne.s32.totalorder %s25, %s28
    %p37 = scmp.eq.s32.totalorder %s20, 7
    %p38 = por %p36, %p37
    %p39 = scmp.ne.s32.totalorder %s28, %s29
    %p40 = scmp.eq.s32.totalorder %s20, 0
    %p41 = por %p39, %p40
    %p42 = scmp.ne.s32.totalorder %s28, %s29
    %p43 = scmp.eq.s32.totalorder %s21, 7
    %p44 = por %p42, %p43
    %p46 = scmp.ne.s32.totalorder %s29, %s45
    %p47 = scmp.eq.s32.totalorder %s21, 0
    %p48 = por %p46, %p47
    %s49 = sld [smem:[#allocation3 + %s15]]
    %s50 = sld [smem:[#allocation3 + %s22]]
    %s51 = ssub.s32 %s49, %s50
    %p52 = scmp.eq.s32.totalorder %s51, 0
    %s54 = sadd.s32 %s53, 1
    %s55 = scalar_select %p52, %s53, %s54
    %p58 = pneg %p52
    %p59 = scmp.eq.s32.totalorder %s15, 7
    %p60 = por %p58, %p59
    %p61 = scmp.ne.s32.totalorder %s53, %s56
    %p62 = scmp.eq.s32.totalorder %s15, 0
    %p63 = por %p61, %p62
    %p64 = scmp.ne.s32.totalorder %s53, %s56
    %p65 = scmp.eq.s32.totalorder %s20, 7
    %p66 = por %p64, %p65
    %p67 = scmp.ne.s32.totalorder %s56, %s57
    %p68 = scmp.eq.s32.totalorder %s20, 0
    %p69 = por %p67, %p68
    %p70 = scmp.ne.s32.totalorder %s56, %s57
    %p71 = scmp.eq.s32.totalorder %s21, 7
    %p72 = por %p70, %p71
    %p74 = scmp.ne.s32.totalorder %s57, %s73
    %p75 = scmp.eq.s32.totalorder %s21, 0
    %p76 = por %p74, %p75
    %s77 = ssub.s32 %s15, %s22
    %p78 = scmp.eq.s32.totalorder %s77, 0
    %s80 = sadd.s32 %s79, 1
    %s81 = scalar_select %p78, %s79, %s80
    %p84 = pneg %p78
    %p85 = scmp.eq.s32.totalorder %s15, 7
    %p86 = por %p84, %p85
    %p87 = scmp.ne.s32.totalorder %s79, %s82
    %p88 = scmp.eq.s32.totalorder %s15, 0
    %p89 = por %p87, %p88
    %p90 = scmp.ne.s32.totalorder %s79, %s82
    %p91 = scmp.eq.s32.totalorder %s20, 7
    %p92 = por %p90, %p91
    %p93 = scmp.ne.s32.totalorder %s82, %s83
    %p94 = scmp.eq.s32.totalorder %s20, 0
    %p95 = por %p93, %p94
    %p96 = scmp.ne.s32.totalorder %s82, %s83
    %p97 = scmp.eq.s32.totalorder %s21, 7
    %p98 = por %p96, %p97
    %p100 = scmp.ne.s32.totalorder %s83, %s99
    %p101 = scmp.eq.s32.totalorder %s21, 0
    %p102 = por %p100, %p101
    %p103 = scmp.le.s32.totalorder 1, %s15
    %p104 = scmp.lt.s32.totalorder %s15, 9
    %p105 = pnand %p103, %p104
    %p106 = pneg %p105
    // Predicated region
    $region9: #{tpu_custom_call.1} parent=5 // pred_check
      _
    $region10: #{tpu_custom_call.1} parent=5 // pred_check_branch
      %108 = sbr.rel (%p105) target = $region12
    $region11: #{tpu_custom_call.1} parent=5 // pred_region
      %s109 = ssub.s32 %s15, 1
    $region12: #{tpu_custom_call.1} parent=5 // pred_fallthru
      _
    %p110 = scmp.lt.s32.totalorder %s15, 8
    // Predicated region
    $region13: #{tpu_custom_call.1} parent=5 // pred_check
      %p111 = pneg %p110
    $region14: #{tpu_custom_call.1} parent=5 // pred_check_branch
      %113 = sbr.rel (%p111) target = $region16
    $region15: #{tpu_custom_call.1} parent=5 // pred_region
      // Predicated region
      $region17: #{tpu_custom_call.1} parent=15 // pred_check
        %p114 = pneg %p35
      $region18: #{tpu_custom_call.1} parent=15 // pred_check_branch
        %116 = sbr.rel (%p114) target = $region20
      $region19: #{tpu_custom_call.1} parent=15 // pred_region
        %s117 = smul.u32 3, %s15
        %p118 = scmp.lt.s32.totalorder %s117, 23
        %s119 = scalar_select %p118, %s117, 23
        %s120 = smul.addr %s119, 8
        %s121 = scalar_lea.vmem %s1, %s120
        %s122 = smul.u32 3, %s15
      $region20: #{tpu_custom_call.1} parent=15 // pred_fallthru
        _
      // Predicated region
      $region21: #{tpu_custom_call.1} parent=15 // pred_check
        %p123 = pneg %p63
      $region22: #{tpu_custom_call.1} parent=15 // pred_check_branch
        %125 = sbr.rel (%p123) target = $region24
      $region23: #{tpu_custom_call.1} parent=15 // pred_region
        %s126 = sld [smem:[#allocation3 + %s15]]
        %p127 = scmp.lt.s32.totalorder %s126, 5
        %s128 = scalar_select %p127, %s126, 5
        %s129 = smul.addr %s128, 4
        %s130 = smul.addr %s129, 8
        %s131 = scalar_lea.vmem %s2, %s130
        %s132 = sld [smem:[#allocation3 + %s15]]
      $region24: #{tpu_custom_call.1} parent=15 // pred_fallthru
        _
    $region16: #{tpu_custom_call.1} parent=5 // pred_fallthru
      _
    %p133 = scmp.le.s32.totalorder 1, %s15
    %p134 = scmp.lt.s32.totalorder %s15, 9
    %p135 = pnand %p133, %p134
    %p136 = pneg %p135
    // Predicated region
    $region25: #{tpu_custom_call.1} parent=5 // pred_check
      _
    $region26: #{tpu_custom_call.1} parent=5 // pred_check_branch
      %138 = sbr.rel (%p135) target = $region28
    $region27: #{tpu_custom_call.1} parent=5 // pred_region
      %s139 = ssub.s32 %s15, 1
      %s140 = smul.u32 3, %s20
      %p141 = scmp.lt.s32.totalorder %s140, 23
      %s142 = scalar_select %p141, %s140, 23
      %s143 = smul.addr %s142, 8
      %s144 = scalar_lea.vmem %s1, %s143
      %p145 = pneg %p41
      %p146 = pneg %p38
      %s147 = sld [smem:[#allocation3 + %s20]]
      %p148 = scmp.lt.s32.totalorder %s147, 5
      %s149 = scalar_select %p148, %s147, 5
      %s150 = smul.addr %s149, 4
      %s151 = smul.addr %s150, 8
      %s152 = scalar_lea.vmem %s2, %s151
      %p153 = pneg %p69
      %p154 = pneg %p66
      %p155 = pneg %p95
      %p156 = pneg %p92
      %s157 = smul.u32 3, %s20
      %p158 = scmp.lt.s32.totalorder %s157, 23
      %s159 = scalar_select %p158, %s157, 23
      %s160 = smul.addr %s159, 8
      %s161 = scalar_lea.vmem %s3, %s160
      %s162 = smul.u32 3, %s20
      %p163 = scmp.lt.s32.totalorder %s162, 23
      %s164 = scalar_select %p163, %s162, 23
      %s165 = smul.addr %s164, 8
      %s166 = scalar_lea.vmem %s1, %s165
      %s167 = smul.u32 3, %s20
      %s168 = sld [smem:[#allocation3 + %s20]]
      %p169 = scmp.lt.s32.totalorder %s168, 5
      %s170 = scalar_select %p169, %s168, 5
      %s171 = smul.addr %s170, 4
      %s172 = smul.addr %s171, 8
      %s173 = scalar_lea.vmem %s2, %s172
      %s174 = sld [smem:[#allocation3 + %s20]]
      %s175 = smul.u32 3, %s20
      %p176 = scmp.lt.s32.totalorder %s175, 23
      %s177 = scalar_select %p176, %s175, 23
      %s178 = smul.addr %s177, 8
      %s179 = scalar_lea.vmem %s3, %s178
      %s180 = smul.u32 3, %s20
      %v181 = vld [vmem:[%s166] sm:$0xff]
      %v182 = vld [vmem:[%s166 + $0x8] sm:$0xff]
      %v183 = vld [vmem:[%s166 + $0x10] sm:$0xff]
      %v184 = vld [vmem:[%s173] sm:$0xff]
      %v185 = vld [vmem:[%s173 + $0x8] sm:$0xff]
      %v186 = vld [vmem:[%s173 + $0x10] sm:$0xff]
      %v187 = vld [vmem:[%s173 + $0x18] sm:$0xff]
      %vm188 = vcmask 261120
      %v190 = vsel %vm188, %v181, 0
      %v193 = vsel %vm188, %v182, 0
      %v196 = vsel %vm188, %v183, 0
      %198 = vmatprep.subr.mxu0 0.0
      %199 = vmatpush1.msra.mxu0 0.0
      %200 = vmatprep.subr.mxu0 0.0
      %201 = vmatpush1.msra.mxu0 0.0
      %202 = vmatprep.subr.mxu0 0.0
      %203 = vmatpush1.msra.mxu0 0.0
      %204 = vmatprep.subr.mxu0 0.0
      %205 = vmatpush1.msra.mxu0 0.0
      %206 = vmatprep.subr.mxu0 0.0
      %207 = vmatpush1.msra.mxu0 0.0
      %208 = vmatprep.subr.mxu0 0.0
      %209 = vmatpush1.msra.mxu0 0.0
      %210 = vmatprep.subr.mxu0 0.0
      %211 = vmatpush1.msra.mxu0 0.0
      %212 = vmatprep.subr.mxu0 0.0
      %213 = vmatpush1.msra.mxu0 0.0
      %214 = vmatprep.subr.mxu0 0.0
      %215 = vmatpush1.msra.mxu0 0.0
      %216 = vmatprep.subr.mxu0 0.0
      %217 = vmatpush1.msra.mxu0 0.0
      %218 = vmatprep.subr.mxu0 0.0
      %219 = vmatpush1.msra.mxu0 0.0
      %220 = vmatprep.subr.mxu0 0.0
      %221 = vmatpush1.msra.mxu0 0.0
      %222 = vmatprep.subr.mxu0 0.0
      %223 = vmatpush1.msra.mxu0 %v187
      %224 = vmatprep.subr.mxu0 0.0
      %225 = vmatpush1.msra.mxu0 %v186
      %226 = vmatprep.subr.mxu0 0.0
      %227 = vmatpush1.msra.mxu0 %v185
      %228 = vmatprep.subr.mxu0 0.0
      %229 = vmatpush1.msra.mxu0 %v184
      %230 = vmatprep.subr.mxu0 0.0
      %231 = vmatpush2.msra.mxu0 0.0
      %232 = vmatprep.subr.mxu0 0.0
      %233 = vmatpush2.msra.mxu0 0.0
      %234 = vmatprep.subr.mxu0 0.0
      %235 = vmatpush2.msra.mxu0 0.0
      %236 = vmatprep.subr.mxu0 0.0
      %237 = vmatpush2.msra.mxu0 0.0
      %238 = vmatprep.subr.mxu0 0.0
      %239 = vmatpush2.msra.mxu0 0.0
      %240 = vmatprep.subr.mxu0 0.0
      %241 = vmatpush2.msra.mxu0 0.0
      %242 = vmatprep.subr.mxu0 0.0
      %243 = vmatpush2.msra.mxu0 0.0
      %244 = vmatprep.subr.mxu0 0.0
      %245 = vmatpush2.msra.mxu0 0.0
      %246 = vmatprep.subr.mxu0 0.0
      %247 = vmatpush2.msra.mxu0 0.0
      %248 = vmatprep.subr.mxu0 0.0
      %249 = vmatpush2.msra.mxu0 0.0
      %250 = vmatprep.subr.mxu0 0.0
      %251 = vmatpush2.msra.mxu0 0.0
      %252 = vmatprep.subr.mxu0 0.0
      %253 = vmatpush2.msra.mxu0 0.0
      %254 = vmatprep.subr.mxu0 0.0
      %255 = vmatpush2.msra.mxu0 0.0
      %256 = vmatprep.subr.mxu0 0.0
      %257 = vmatpush2.msra.mxu0 0.0
      %258 = vmatprep.subr.mxu0 0.0
      %259 = vmatpush2.msra.mxu0 0.0
      %260 = vmatprep.subr.mxu0 0.0
      %261 = vmatpush2.msra.mxu0 0.0
      %262 = vmatprep.mubr.f32.mxu0 0.0
      %263 = vmatmul.mubr.f32.gmra.mxu0 %v190
      %v264 = vpop.f32.mrf.mxu0
      %v265 = vadd.f32 0.0, %v264
      %v266 = vpop.f32.mrf.mxu0
      %267 = vmatprep.mubr.f32.mxu0 0.0
      %268 = vmatmul.mubr.f32.gmra.mxu0 %v193
      %v269 = vpop.f32.mrf.mxu0
      %v270 = vadd.f32 0.0, %v269
      %v271 = vpop.f32.mrf.mxu0
      %272 = vmatprep.mubr.f32.mxu0 0.0
      %273 = vmatmul.mubr.f32.gmra.mxu0 %v196
      %v274 = vpop.f32.mrf.mxu0
      %v275 = vadd.f32 0.0, %v274
      %v276 = vpop.f32.mrf.mxu0
      %277 = vdwg.mxu0
      %v278 = vmul.f32 %v265, %v265
      %v279 = vmul.f32 %v270, %v270
      %v280 = vmul.f32 %v275, %v275
      %vm281 = vcmask 523264
      %v282 = vsel %vm281, %v278, 0.0
      %283 = vadd.xlane.f32.xlu0 %v282
      %v284 = vpop.xlane.xlu0 %283
      %v285 = vsel %vm281, %v279, 0.0
      %286 = vadd.xlane.f32.xlu0 %v285
      %v287 = vpop.xlane.xlu0 %286
      %v288 = vsel %vm281, %v280, 0.0
      %289 = vadd.xlane.f32.xlu0 %v288
      %v290 = vpop.xlane.xlu0 %289
      %v291 = vmax.f32 %v284, 1e-24
      %v292 = vmax.f32 %v287, 1e-24
      %v293 = vmax.f32 %v290, 1e-24
      %v294 = vrsqrt.pop %v291
      %v295 = vrsqrt.pop %v292
      %v296 = vrsqrt.pop %v293
      %v297 = vmul.f32 %v265, %v294
      %v298 = vmul.f32 %v270, %v295
      %v299 = vmul.f32 %v275, %v296
      %300 = vst.msk [vmem:[%s179] sm:$0xff] %vm281, %v297
      %301 = vst.msk [vmem:[%s179 + $0x8] sm:$0xff] %vm281, %v298
      %302 = vst.msk [vmem:[%s179 + $0x10] sm:$0xff] %vm281, %v299
      %s303 = smul.u32 3, %s20
      %p304 = scmp.lt.s32.totalorder %s303, 23
      %s305 = scalar_select %p304, %s303, 23
      %s306 = smul.addr %s305, 8
      %s307 = scalar_lea.vmem %s3, %s306
      // Predicated region
      $region29: #{tpu_custom_call.1} parent=27 // pred_check
        %p308 = pneg %p92
      $region30: #{tpu_custom_call.1} parent=27 // pred_check_branch
        %310 = sbr.rel (%p308) target = $region32
      $region31: #{tpu_custom_call.1} parent=27 // pred_region
        %s311 = smul.u32 3, %s20
      $region32: #{tpu_custom_call.1} parent=27 // pred_fallthru
        _
    $region28: #{tpu_custom_call.1} parent=5 // pred_fallthru
      _
    %p312 = scmp.le.s32.totalorder 2, %s15
    // Predicated region
    $region33: #{tpu_custom_call.1} parent=5 // pred_check
      %p313 = pneg %p312
    $region34: #{tpu_custom_call.1} parent=5 // pred_check_branch
      %315 = sbr.rel (%p313) target = $region36
    $region35: #{tpu_custom_call.1} parent=5 // pred_region
      %s316 = ssub.s32 %s15, 2
      // Predicated region
      $region37: #{tpu_custom_call.1} parent=35 // pred_check
        %p317 = pneg %p98
      $region38: #{tpu_custom_call.1} parent=35 // pred_check_branch
        %319 = sbr.rel (%p317) target = $region40
      $region39: #{tpu_custom_call.1} parent=35 // pred_region
        %s320 = smul.u32 3, %s21
        %p321 = scmp.lt.s32.totalorder %s320, 23
        %s322 = scalar_select %p321, %s320, 23
        %s323 = smul.addr %s322, 8
        %s324 = scalar_lea.vmem %s3, %s323
      $region40: #{tpu_custom_call.1} parent=35 // pred_fallthru
        _
    $region36: #{tpu_custom_call.1} parent=5 // pred_fallthru
      _
  $region6: #{tpu_custom_call.1} parent=0 // loop_footer
    %s19 = sadd.s32 1, %s15
  $region7: #{tpu_custom_call.1} parent=0 // loop_footer_branch
    %14 = sbr.rel target = $region3
  $region8: #{tpu_custom_call.1} parent=0 // loop_exit
    _

</llo_original>
